<compile_context>
chip_gen: v5e
topology: v5e:2x2
jax: 0.10.0
libtpu: 0.0.40
codegen_flags: <defaults>
</compile_context>

<pallas_src>
import functools

import jax
import jax.numpy as jnp
from jax.experimental import pallas as pl
from jax.experimental.pallas import tpu as pltpu


def _branch_two_linear_kernel(x_ref, w0_ref, b0_ref, w1_ref, b1_ref,
                              y0_ref, y1_ref, acc_ref):
    """Fused chained Linear -> Linear for one (tm, :) batch tile.

    Grid = (M tiles, K tiles).  K is the reduction axis of arm_0; partial
    products accumulate in an f32 VMEM scratch.  On the last K step the f32
    epilogue runs, y0 is stored, and arm_1 consumes the stored y0 on-chip.
    """
    k = pl.program_id(1)

    @pl.when(k == 0)
    def _():
        acc_ref[...] = jnp.zeros_like(acc_ref)

    # arm_0 partial: acc += x_tile @ W0_tile   (bf16 operands, f32 MXU accum)
    acc_ref[...] += jnp.dot(x_ref[...], w0_ref[...],
                            preferred_element_type=jnp.float32)

    @pl.when(k == pl.num_programs(1) - 1)
    def _():
        # f32 epilogue (bias add in f32, cast only on store).
        y0 = acc_ref[...] + b0_ref[...]
        y0_out = y0.astype(y0_ref.dtype)
        y0_ref[...] = y0_out
        # arm_1 consumes arm_0's *returned* output (Branch chains its arms);
        # y0 stays in VMEM/vregs, no HBM round trip before being consumed.
        y1 = jnp.dot(y0_out.astype(w1_ref.dtype), w1_ref[...],
                     preferred_element_type=jnp.float32)
        y1 = y1 + b1_ref[...]
        y1_ref[...] = y1.astype(y1_ref.dtype)


def _cdiv(a, b):
    return -(-a // b)


def _round_up(v, m):
    return (v + m - 1) // m * m


def _pad2(a, rows, cols):
    r, c = a.shape
    if r == rows and c == cols:
        return a
    return jnp.pad(a, ((0, rows - r), (0, cols - c)))


@functools.partial(jax.jit, static_argnames=("tm", "compute_dtype"))
def branch_forward(x, params, *, tm=None, compute_dtype=jnp.bfloat16):
    """Pallas equivalent of Branch([Linear, Linear]).forward(x), dict_out=False.

    Returns [y0, y1] with y0 = arm_0(x) and y1 = arm_1(y0) (chained arms)."""
    (w0, b0), (w1, b1) = params
    batch, hidden = x.shape
    out0 = w0.shape[1]
    out1 = w1.shape[1]
    assert w1.shape[0] == out0, "arm_1 consumes arm_0's output (chained Branch)"

    out_dtype = x.dtype
    c_isz = jnp.dtype(compute_dtype).itemsize
    out_isz = jnp.dtype(out_dtype).itemsize

    # ---- lane-dense padded sizes (multiples of 128 on the lane axis).
    n0_p = _round_up(out0, 128)
    n1_p = _round_up(out1, 128)
    k128 = _round_up(hidden, 128)
    # M stays unpadded for batch >= 8 (no extra HBM pass over x / y); partial
    # last-tile stores are masked by Pallas.  Tiny batches pad to one sublane.
    m = batch if batch >= 8 else 8

    # ---- generation-aware VMEM budget: ~85% of physical per-core VMEM
    #      (v5e/v6e 128 MiB, v7x 64 MiB), conservative fallback if unknown.
    try:
        phys_vmem = int(getattr(pltpu.get_tpu_info(), "vmem_capacity_bytes",
                                64 * 1024 * 1024))
    except Exception:  # pragma: no cover - non-TPU tracing fallback
        phys_vmem = 64 * 1024 * 1024
    vmem_cap = int(phys_vmem * 0.85)

    # ---- M tile: big (mem-bound roofline favors >=512), but ensure >= 2 tiles
    #      when the batch allows so both TensorCores get work.
    if tm is None:
        tm = 512
    tm = max(8, (int(tm) // 8) * 8)
    if tm >= m:
        tm = m                           # full-extent M block (always legal)
    if m >= 16 and _cdiv(m, tm) < 2:
        tm = _round_up(_cdiv(m, 2), 8)   # split batch across the two TCs

    def footprint(tm_, tk_):
        blocks = 2 * (tm_ * tk_ * c_isz            # x tile (double-buffered)
                      + tk_ * n0_p * c_isz         # W0 tile
                      + n0_p * n1_p * c_isz        # W1 (constant index map)
                      + (n0_p + n1_p) * 4          # biases (f32)
                      + tm_ * n0_p * out_isz       # y0 tile
                      + tm_ * n1_p * out_isz)      # y1 tile
        return blocks + tm_ * n0_p * 4             # f32 accumulator scratch

    # ---- K tiling only when the footprint would blow the VMEM budget.
    n_k = 1
    tk = k128
    while footprint(tm, tk) > vmem_cap:
        if tk > 128:
            n_k += 1
            tk = _round_up(_cdiv(k128, n_k), 128)
        elif tm > 8:
            tm = max(8, _round_up(tm // 2, 8) if tm // 2 >= 8 else 8)
        else:
            break                                   # let the compiler decide
    k_pad = tk * n_k

    grid = (_cdiv(m, tm), n_k)

    # ---- zero-pad K/N (zero padding cancels exactly) and cast to bf16.
    x_p = _pad2(x, m, k_pad).astype(compute_dtype)
    w0_p = _pad2(w0, k_pad, n0_p).astype(compute_dtype)
    b0_p = _pad2(b0, 1, n0_p).astype(jnp.float32)
    w1_p = _pad2(w1, n0_p, n1_p).astype(compute_dtype)
    b1_p = _pad2(b1, 1, n1_p).astype(jnp.float32)

    vmem_bytes = min(vmem_cap,
                     max(int(footprint(tm, tk) * 1.25) + (2 << 20), 16 << 20))

    flops = 2 * m * (k_pad * n0_p + n0_p * n1_p)
    bytes_accessed = (x_p.size * c_isz + w0_p.size * c_isz + w1_p.size * c_isz
                      + b0_p.size * 4 + b1_p.size * 4
                      + m * n0_p * out_isz + m * n1_p * out_isz)

    y0_p, y1_p = pl.pallas_call(
        _branch_two_linear_kernel,
        out_shape=(
            jax.ShapeDtypeStruct((m, n0_p), out_dtype),
            jax.ShapeDtypeStruct((m, n1_p), out_dtype),
        ),
        grid=grid,
        in_specs=[
            pl.BlockSpec((tm, tk), lambda i, k: (i, k)),      # x (pipelined)
            pl.BlockSpec((tk, n0_p), lambda i, k: (k, 0)),    # W0 (K-tiled)
            pl.BlockSpec((1, n0_p), lambda i, k: (0, 0)),     # b0 (resident)
            pl.BlockSpec((n0_p, n1_p), lambda i, k: (0, 0)),  # W1 (resident)
            pl.BlockSpec((1, n1_p), lambda i, k: (0, 0)),     # b1 (resident)
        ],
        out_specs=(
            pl.BlockSpec((tm, n0_p), lambda i, k: (i, 0)),
            pl.BlockSpec((tm, n1_p), lambda i, k: (i, 0)),
        ),
        scratch_shapes=[pltpu.VMEM((tm, n0_p), jnp.float32)],
        compiler_params=pltpu.CompilerParams(
            dimension_semantics=("parallel", "arbitrary"),
            vmem_limit_bytes=vmem_bytes,
        ),
        cost_estimate=pl.CostEstimate(
            flops=flops, transcendentals=0, bytes_accessed=bytes_accessed),
    )(x_p, w0_p, b0_p, w1_p, b1_p)

    # Strip padding only when padding was actually applied (no-copy fast path).
    y0 = y0_p if (m == batch and n0_p == out0) else y0_p[:batch, :out0]
    y1 = y1_p if (m == batch and n1_p == out1) else y1_p[:batch, :out1]
    return [y0, y1]


def init_params(key, hidden, out0, out1, dtype=jnp.float32):
    """Two chained nn.Linear arms: arm_0: hidden->out0, arm_1: out0->out1."""
    k0w, k0b, k1w, k1b = jax.random.split(key, 4)
    bound0 = 1.0 / (hidden ** 0.5)
    bound1 = 1.0 / (out0 ** 0.5)
    w0 = jax.random.uniform(k0w, (hidden, out0), dtype, -bound0, bound0)
    b0 = jax.random.uniform(k0b, (1, out0), dtype, -bound0, bound0)
    w1 = jax.random.uniform(k1w, (out0, out1), dtype, -bound1, bound1)
    b1 = jax.random.uniform(k1b, (1, out1), dtype, -bound1, bound1)
    return [(w0, b0), (w1, b1)]


if __name__ == "__main__":
    # Small, deliberately non-128-aligned shapes to exercise the K/N padding
    # and the unpadded-M / partial-tile path.
    batch, hidden, out0, out1 = 64, 96, 80, 48
    key = jax.random.PRNGKey(0)
    kx, kp = jax.random.split(key)
    x = jax.random.normal(kx, (batch, hidden), jnp.float32)
    params = init_params(kp, hidden, out0, out1)

    outs = branch_forward(x, params)
    outs = [jax.block_until_ready(o) for o in outs]

    (w0, b0), (w1, b1) = params
    # Reference matching the kernel's numerics: bf16 operands, f32 accumulation,
    # arm_1 consuming the (f32-stored, bf16-cast) y0 -- chained Branch semantics.
    bf = jnp.bfloat16
    r0 = jnp.dot(x.astype(bf), w0.astype(bf),
                 preferred_element_type=jnp.float32) + b0
    r1 = jnp.dot(r0.astype(bf), w1.astype(bf),
                 preferred_element_type=jnp.float32) + b1
    # Pure f32 reference (PyTorch semantics) -- loose sanity check only.
    f0 = x @ w0 + b0
    f1 = f0 @ w1 + b1

    for got, want_bf, want_f32, n in zip(outs, [r0, r1], [f0, f1], [out0, out1]):
        assert got.shape == (batch, n), got.shape
        assert got.dtype == jnp.float32, got.dtype
        err_bf = float(jnp.max(jnp.abs(got - want_bf)))
        assert jnp.allclose(got, want_bf, atol=2e-2, rtol=2e-2), \
            f"max abs err vs bf16-matched ref {err_bf}"
        err_f32 = float(jnp.max(jnp.abs(got - want_f32)))
        assert jnp.allclose(got, want_f32, atol=1e-1, rtol=1e-1), \
            f"max abs err vs f32 ref {err_f32}"

    print("KERNEL_OK")
</pallas_src>

<mosaic_0001>
module attributes {stable_mosaic.version = 11 : i64} {
  func.func @_branch_two_linear_kernel(%arg0: i32, %arg1: i32, %arg2: memref<32x128xbf16, #tpu.memory_space<vmem>>, %arg3: memref<128x128xbf16, #tpu.memory_space<vmem>>, %arg4: memref<1x128xf32, #tpu.memory_space<vmem>>, %arg5: memref<128x128xbf16, #tpu.memory_space<vmem>>, %arg6: memref<1x128xf32, #tpu.memory_space<vmem>>, %arg7: memref<32x128xf32, #tpu.memory_space<vmem>>, %arg8: memref<32x128xf32, #tpu.memory_space<vmem>>, %arg9: memref<32x128xf32, #tpu.memory_space<vmem>>) attributes {dimension_semantics = [#tpu.dimension_semantics<parallel>, #tpu.dimension_semantics<arbitrary>], iteration_bounds = array<i64: 2, 1>, scalar_prefetch = 0 : i64, scratch_operands = 1 : i64, tpu.core_type = #tpu.core_type<tc>, window_params = [{transform_indices = @transform_0, window_bounds = array<i64: 32, 128>}, {transform_indices = @transform_1, window_bounds = array<i64: 128, 128>}, {pipeline_mode = #tpu.pipeline_mode<synchronous>, transform_indices = @transform_2, window_bounds = array<i64: 1, 128>}, {pipeline_mode = #tpu.pipeline_mode<synchronous>, transform_indices = @transform_3, window_bounds = array<i64: 128, 128>}, {pipeline_mode = #tpu.pipeline_mode<synchronous>, transform_indices = @transform_4, window_bounds = array<i64: 1, 128>}, {transform_indices = @transform_5, window_bounds = array<i64: 32, 128>}, {transform_indices = @transform_6, window_bounds = array<i64: 32, 128>}]} {
    %c0_i32 = arith.constant 0 : i32
    %0 = arith.cmpi eq, %arg1, %c0_i32 : i32
    %1 = arith.extui %0 : i1 to i32
    %c0_i32_0 = arith.constant 0 : i32
    %2 = arith.cmpi ne, %1, %c0_i32_0 : i32
    scf.if %2 {
      %cst_10 = arith.constant 0.000000e+00 : f32
      %12 = vector.broadcast %cst_10 : f32 to vector<32x128xf32>
      %c0_11 = arith.constant 0 : index
      %c0_12 = arith.constant 0 : index
      %13 = vector.load %arg9[%c0_11, %c0_12] : memref<32x128xf32, #tpu.memory_space<vmem>>, vector<32x128xf32>
      tpu.vector_store %arg9[%c0_11, %c0_12], %12 {strides = array<i32>} : memref<32x128xf32, #tpu.memory_space<vmem>>, vector<32x128xf32>,
    } else {
    }
    %c0 = arith.constant 0 : index
    %c0_1 = arith.constant 0 : index
    %3 = vector.load %arg9[%c0, %c0_1] : memref<32x128xf32, #tpu.memory_space<vmem>>, vector<32x128xf32>
    %c0_2 = arith.constant 0 : index
    %c0_3 = arith.constant 0 : index
    %4 = vector.load %arg2[%c0_2, %c0_3] : memref<32x128xbf16, #tpu.memory_space<vmem>>, vector<32x128xbf16>
    %c0_4 = arith.constant 0 : index
    %c0_5 = arith.constant 0 : index
    %5 = vector.load %arg3[%c0_4, %c0_5] : memref<128x128xbf16, #tpu.memory_space<vmem>>, vector<128x128xbf16>
    %cst = arith.constant dense<0.000000e+00> : vector<32x128xf32>
    %6 = tpu.matmul %4, %5, %cst {dimension_numbers = #tpu.dot_dimension_numbers<[1], [0], [0], [1], [0, 0, 1, 1], [], []>} : vector<32x128xbf16>, vector<128x128xbf16>, vector<32x128xf32> -> vector<32x128xf32>
    %7 = arith.addf %3, %6 : vector<32x128xf32>
    %c0_6 = arith.constant 0 : index
    %c0_7 = arith.constant 0 : index
    %8 = vector.load %arg9[%c0_6, %c0_7] : memref<32x128xf32, #tpu.memory_space<vmem>>, vector<32x128xf32>
    tpu.vector_store %arg9[%c0_6, %c0_7], %7 {strides = array<i32>} : memref<32x128xf32, #tpu.memory_space<vmem>>, vector<32x128xf32>,
    %c0_i32_8 = arith.constant 0 : i32
    %9 = arith.cmpi eq, %arg1, %c0_i32_8 : i32
    %10 = arith.extui %9 : i1 to i32
    %c0_i32_9 = arith.constant 0 : i32
    %11 = arith.cmpi ne, %10, %c0_i32_9 : i32
    scf.if %11 {
      %c0_10 = arith.constant 0 : index
      %c0_11 = arith.constant 0 : index
      %12 = vector.load %arg9[%c0_10, %c0_11] : memref<32x128xf32, #tpu.memory_space<vmem>>, vector<32x128xf32>
      %c0_12 = arith.constant 0 : index
      %c0_13 = arith.constant 0 : index
      %13 = vector.load %arg4[%c0_12, %c0_13] : memref<1x128xf32, #tpu.memory_space<vmem>>, vector<1x128xf32>
      %14 = vector.broadcast %13 : vector<1x128xf32> to vector<32x128xf32>
      %15 = arith.addf %12, %14 : vector<32x128xf32>
      %c0_14 = arith.constant 0 : index
      %c0_15 = arith.constant 0 : index
      %16 = vector.load %arg7[%c0_14, %c0_15] : memref<32x128xf32, #tpu.memory_space<vmem>>, vector<32x128xf32>
      tpu.vector_store %arg7[%c0_14, %c0_15], %15 {strides = array<i32>} : memref<32x128xf32, #tpu.memory_space<vmem>>, vector<32x128xf32>,
      %17 = arith.truncf %15 : vector<32x128xf32> to vector<32x128xbf16>
      %c0_16 = arith.constant 0 : index
      %c0_17 = arith.constant 0 : index
      %18 = vector.load %arg5[%c0_16, %c0_17] : memref<128x128xbf16, #tpu.memory_space<vmem>>, vector<128x128xbf16>
      %cst_18 = arith.constant dense<0.000000e+00> : vector<32x128xf32>
      %19 = tpu.matmul %17, %18, %cst_18 {dimension_numbers = #tpu.dot_dimension_numbers<[1], [0], [0], [1], [0, 0, 1, 1], [], []>} : vector<32x128xbf16>, vector<128x128xbf16>, vector<32x128xf32> -> vector<32x128xf32>
      %c0_19 = arith.constant 0 : index
      %c0_20 = arith.constant 0 : index
      %20 = vector.load %arg6[%c0_19, %c0_20] : memref<1x128xf32, #tpu.memory_space<vmem>>, vector<1x128xf32>
      %21 = vector.broadcast %20 : vector<1x128xf32> to vector<32x128xf32>
      %22 = arith.addf %19, %21 : vector<32x128xf32>
      %c0_21 = arith.constant 0 : index
      %c0_22 = arith.constant 0 : index
      %23 = vector.load %arg8[%c0_21, %c0_22] : memref<32x128xf32, #tpu.memory_space<vmem>>, vector<32x128xf32>
      tpu.vector_store %arg8[%c0_21, %c0_22], %22 {strides = array<i32>} : memref<32x128xf32, #tpu.memory_space<vmem>>, vector<32x128xf32>,
    } else {
    }
    return
  }
  func.func @transform_0(%arg0: i32, %arg1: i32) -> (i32, i32) {
    %c0_i32 = arith.constant 0 : i32
    return %arg0, %arg1 : i32, i32
  }
  func.func @transform_1(%arg0: i32, %arg1: i32) -> (i32, i32) {
    %c0_i32 = arith.constant 0 : i32
    %c0_i32_0 = arith.constant 0 : i32
    return %arg1, %c0_i32 : i32, i32
  }
  func.func @transform_2(%arg0: i32, %arg1: i32) -> (i32, i32) {
    %c0_i32 = arith.constant 0 : i32
    %c0_i32_0 = arith.constant 0 : i32
    %c0_i32_1 = arith.constant 0 : i32
    return %c0_i32, %c0_i32_0 : i32, i32
  }
  func.func @transform_3(%arg0: i32, %arg1: i32) -> (i32, i32) {
    %c0_i32 = arith.constant 0 : i32
    %c0_i32_0 = arith.constant 0 : i32
    %c0_i32_1 = arith.constant 0 : i32
    return %c0_i32, %c0_i32_0 : i32, i32
  }
  func.func @transform_4(%arg0: i32, %arg1: i32) -> (i32, i32) {
    %c0_i32 = arith.constant 0 : i32
    %c0_i32_0 = arith.constant 0 : i32
    %c0_i32_1 = arith.constant 0 : i32
    return %c0_i32, %c0_i32_0 : i32, i32
  }
  func.func @transform_5(%arg0: i32, %arg1: i32) -> (i32, i32) {
    %c0_i32 = arith.constant 0 : i32
    %c0_i32_0 = arith.constant 0 : i32
    return %arg0, %c0_i32 : i32, i32
  }
  func.func @transform_6(%arg0: i32, %arg1: i32) -> (i32, i32) {
    %c0_i32 = arith.constant 0 : i32
    %c0_i32_0 = arith.constant 0 : i32
    return %arg0, %c0_i32 : i32, i32
  }
}

</mosaic_0001>

<llo_original>
// kernel: branch_forward.1
$region0: #{branch_forward.1}
  #allocation0 [shape = 'u32[]', space=smem, size = 0x4, offset = 0x4, fixed_abs, tag = 'smem constant byte address 0x4 - core index']
  #allocation1 [shape = 'u32[72,128]{1,0:T(1,128)}', space=vmem, size = 0x9000, scoped, tag = 'internal scratch']
  #allocation2 [shape = 'f32[32,128]{1,0:T(8,128)}', space=vmem, size = 0x4000, scoped, tag = 'scratch operand']
  %s0 = inlined_call_operand.vmem [shape: bf16[64,128], index: 0, kind: input, shape index: {}]
  %s1 = inlined_call_operand.vmem [shape: bf16[128,128], index: 1, kind: input, shape index: {}]
  %s2 = inlined_call_operand.vmem [shape: f32[1,128], index: 2, kind: input, shape index: {}]
  %s3 = inlined_call_operand.vmem [shape: bf16[128,128], index: 3, kind: input, shape index: {}]
  %s4 = inlined_call_operand.vmem [shape: f32[1,128], index: 4, kind: input, shape index: {}]
  %s5 = inlined_call_operand.hbm [shape: f32[64,128], index: 5, kind: output, shape index: {0}]
  %s6 = inlined_call_operand.vmem [shape: f32[64,128], index: 6, kind: output, shape index: {1}]
  %7 = xla_tuple %s5, %s6
  %s8 = sld [smem:[#allocation0]]
  $region69: #{branch_forward.1} parent=0
    _
  %s10 = ssub.s32 1, %s8
  %s11 = scalar_select 0, %s10, %s8
  $region1: #{branch_forward.1} parent=0
    #allocation3 [shape = 'u8[32768]{0}', space=vmem, size = 0x8000, scoped, tag = 'output window, operand 0']
    #allocation4 [shape = 's32[2]{0}', space=sflag, size = 0x8, scoped, tag = 'scoped memory for branch_forward.1']
    %12 = vsyncpa [#allocation4], 0
    %s13 = scalar_lea.sflag [#allocation4], 1
    %14 = vsyncpa %s13, 0
    loop: start=0, step=1, limit=4
    $region2: #{branch_forward.1} parent=1 // loop_pre_header
      _
    $region3: #{branch_forward.1} parent=1 // loop_header
      %s16 = sphi 0, %s20
      %p17 = scmp.ge.s32.totalorder %s16, 4
      %s23 = sphi 0, %s35
      %s24 = sphi 0, %s31
      %s25 = sphi 0, %s23
      %s26 = sphi 0, %s24
      %s27 = sphi 0, %s25
      %s28 = sphi 0, %s26
      %s40 = sphi 0, %s42
      %s43 = sphi 0, %s40
      %s44 = sphi 0, %s43
      %s60 = sphi 0, %s44
      %s66 = sphi 0, %s68
      %s69 = sphi 0, %s66
      %s70 = sphi 0, %s69
      %s86 = sphi 0, %s70
      %s90 = sphi 0, %s90
      %s92 = sphi 0, %s90
      %s93 = sphi 0, %s92
      %s107 = sphi 0, %s93
      %s111 = sphi 0, %s111
      %s113 = sphi 0, %s111
      %s114 = sphi 0, %s113
      %s128 = sphi 0, %s114
      %s132 = sphi 0, %s132
      %s134 = sphi 0, %s132
      %s135 = sphi 0, %s134
      %s149 = sphi 0, %s135
      %s155 = sphi 0, %s157
      %s158 = sphi 0, %s155
      %s159 = sphi 0, %s158
      %s175 = sphi 0, %s159
      %s181 = sphi 0, %s183
      %s184 = sphi 0, %s181
      %s185 = sphi 0, %s184
      %s201 = sphi 0, %s185
    $region4: #{branch_forward.1} parent=1 // loop_header_branch
      %19 = sbr.rel (%p17) target = $region8
    $region5: #{branch_forward.1} parent=1 // loop_body
      %s21 = ssub.s32 %s16, 1
      %s22 = ssub.s32 %s16, 2
      %s29 = sadd.s32 1, %s24
      %p30 = scmp.ge.s32.totalorder %s29, 1
      %s31 = scalar_select %p30, 0, %s29
      %s32 = sadd.s32 1, %s23
      %s33 = scalar_select %p30, %s32, %s23
      %p34 = scmp.ge.s32.totalorder %s33, 2
      %s35 = scalar_select %p34, 0, %s33
      %s36 = ssub.s32 %s23, %s35
      %s37 = ssub.s32 %s24, %s31
      %s38 = sor.u32 %s36, %s37
      %p39 = scmp.eq.s32.totalorder %s38, 0
      %s41 = sadd.s32 %s40, 1
      %s42 = scalar_select %p39, %s40, %s41
      %p45 = pneg %p39
      %p46 = scmp.eq.s32.totalorder %s16, 1
      %p47 = por %p45, %p46
      %p48 = scmp.ne.s32.totalorder %s40, %s43
      %p49 = scmp.eq.s32.totalorder %s16, 0
      %p50 = por %p48, %p49
      %p51 = scmp.ne.s32.totalorder %s40, %s43
      %p52 = scmp.eq.s32.totalorder %s21, 1
      %p53 = por %p51, %p52
      %p54 = scmp.ne.s32.totalorder %s43, %s44
      %p55 = scmp.eq.s32.totalorder %s21, 0
      %p56 = por %p54, %p55
      %p57 = scmp.ne.s32.totalorder %s43, %s44
      %p58 = scmp.eq.s32.totalorder %s22, 1
      %p59 = por %p57, %p58
      %p61 = scmp.ne.s32.totalorder %s44, %s60
      %p62 = scmp.eq.s32.totalorder %s22, 0
      %p63 = por %p61, %p62
      %s64 = ssub.s32 %s24, %s31
      %p65 = scmp.eq.s32.totalorder %s64, 0
      %s67 = sadd.s32 %s66, 1
      %s68 = scalar_select %p65, %s66, %s67
      %p71 = pneg %p65
      %p72 = scmp.eq.s32.totalorder %s16, 1
      %p73 = por %p71, %p72
      %p74 = scmp.ne.s32.totalorder %s66, %s69
      %p75 = scmp.eq.s32.totalorder %s16, 0
      %p76 = por %p74, %p75
      %p77 = scmp.ne.s32.totalorder %s66, %s69
      %p78 = scmp.eq.s32.totalorder %s21, 1
      %p79 = por %p77, %p78
      %p80 = scmp.ne.s32.totalorder %s69, %s70
      %p81 = scmp.eq.s32.totalorder %s21, 0
      %p82 = por %p80, %p81
      %p83 = scmp.ne.s32.totalorder %s69, %s70
      %p84 = scmp.eq.s32.totalorder %s22, 1
      %p85 = por %p83, %p84
      %p87 = scmp.ne.s32.totalorder %s70, %s86
      %p88 = scmp.eq.s32.totalorder %s22, 0
      %p89 = por %p87, %p88
      %s91 = sadd.s32 %s90, 1
      %p94 = scmp.eq.s32.totalorder %s16, 1
      %p95 = scmp.ne.s32.totalorder %s90, %s92
      %p96 = scmp.eq.s32.totalorder %s16, 0
      %p97 = por %p95, %p96
      %p98 = scmp.ne.s32.totalorder %s90, %s92
      %p99 = scmp.eq.s32.totalorder %s21, 1
      %p100 = por %p98, %p99
      %p101 = scmp.ne.s32.totalorder %s92, %s93
      %p102 = scmp.eq.s32.totalorder %s21, 0
      %p103 = por %p101, %p102
      %p104 = scmp.ne.s32.totalorder %s92, %s93
      %p105 = scmp.eq.s32.totalorder %s22, 1
      %p106 = por %p104, %p105
      %p108 = scmp.ne.s32.totalorder %s93, %s107
      %p109 = scmp.eq.s32.totalorder %s22, 0
      %p110 = por %p108, %p109
      %s112 = sadd.s32 %s111, 1
      %p115 = scmp.eq.s32.totalorder %s16, 1
      %p116 = scmp.ne.s32.totalorder %s111, %s113
      %p117 = scmp.eq.s32.totalorder %s16, 0
      %p118 = por %p116, %p117
      %p119 = scmp.ne.s32.totalorder %s111, %s113
      %p120 = scmp.eq.s32.totalorder %s21, 1
      %p121 = por %p119, %p120
      %p122 = scmp.ne.s32.totalorder %s113, %s114
      %p123 = scmp.eq.s32.totalorder %s21, 0
      %p124 = por %p122, %p123
      %p125 = scmp.ne.s32.totalorder %s113, %s114
      %p126 = scmp.eq.s32.totalorder %s22, 1
      %p127 = por %p125, %p126
      %p129 = scmp.ne.s32.totalorder %s114, %s128
      %p130 = scmp.eq.s32.totalorder %s22, 0
      %p131 = por %p129, %p130
      %s133 = sadd.s32 %s132, 1
      %p136 = scmp.eq.s32.totalorder %s16, 1
      %p137 = scmp.ne.s32.totalorder %s132, %s134
      %p138 = scmp.eq.s32.totalorder %s16, 0
      %p139 = por %p137, %p138
      %p140 = scmp.ne.s32.totalorder %s132, %s134
      %p141 = scmp.eq.s32.totalorder %s21, 1
      %p142 = por %p140, %p141
      %p143 = scmp.ne.s32.totalorder %s134, %s135
      %p144 = scmp.eq.s32.totalorder %s21, 0
      %p145 = por %p143, %p144
      %p146 = scmp.ne.s32.totalorder %s134, %s135
      %p147 = scmp.eq.s32.totalorder %s22, 1
      %p148 = por %p146, %p147
      %p150 = scmp.ne.s32.totalorder %s135, %s149
      %p151 = scmp.eq.s32.totalorder %s22, 0
      %p152 = por %p150, %p151
      %s153 = ssub.s32 %s23, %s35
      %p154 = scmp.eq.s32.totalorder %s153, 0
      %s156 = sadd.s32 %s155, 1
      %s157 = scalar_select %p154, %s155, %s156
      %p160 = pneg %p154
      %p161 = scmp.eq.s32.totalorder %s16, 1
      %p162 = por %p160, %p161
      %p163 = scmp.ne.s32.totalorder %s155, %s158
      %p164 = scmp.eq.s32.totalorder %s16, 0
      %p165 = por %p163, %p164
      %p166 = scmp.ne.s32.totalorder %s155, %s158
      %p167 = scmp.eq.s32.totalorder %s21, 1
      %p168 = por %p166, %p167
      %p169 = scmp.ne.s32.totalorder %s158, %s159
      %p170 = scmp.eq.s32.totalorder %s21, 0
      %p171 = por %p169, %p170
      %p172 = scmp.ne.s32.totalorder %s158, %s159
      %p173 = scmp.eq.s32.totalorder %s22, 1
      %p174 = por %p172, %p173
      %p176 = scmp.ne.s32.totalorder %s159, %s175
      %p177 = scmp.eq.s32.totalorder %s22, 0
      %p178 = por %p176, %p177
      %s179 = ssub.s32 %s23, %s35
      %p180 = scmp.eq.s32.totalorder %s179, 0
      %s182 = sadd.s32 %s181, 1
      %s183 = scalar_select %p180, %s181, %s182
      %p186 = pneg %p180
      %p187 = scmp.eq.s32.totalorder %s16, 1
      %p188 = por %p186, %p187
      %p189 = scmp.ne.s32.totalorder %s181, %s184
      %p190 = scmp.eq.s32.totalorder %s16, 0
      %p191 = por %p189, %p190
      %p192 = scmp.ne.s32.totalorder %s181, %s184
      %p193 = scmp.eq.s32.totalorder %s21, 1
      %p194 = por %p192, %p193
      %p195 = scmp.ne.s32.totalorder %s184, %s185
      %p196 = scmp.eq.s32.totalorder %s21, 0
      %p197 = por %p195, %p196
      %p198 = scmp.ne.s32.totalorder %s184, %s185
      %p199 = scmp.eq.s32.totalorder %s22, 1
      %p200 = por %p198, %p199
      %p202 = scmp.ne.s32.totalorder %s185, %s201
      %p203 = scmp.eq.s32.totalorder %s22, 0
      %p204 = por %p202, %p203
      %p205 = scmp.le.s32.totalorder 1, %s16
      %p206 = scmp.lt.s32.totalorder %s16, 3
      %p207 = pnand %p205, %p206
      %p208 = pneg %p207
      // Predicated region
      $region9: #{branch_forward.1} parent=5 // pred_check
        _
      $region10: #{branch_forward.1} parent=5 // pred_check_branch
        %210 = sbr.rel (%p207) target = $region12
      $region11: #{branch_forward.1} parent=5 // pred_region
        %s211 = ssub.s32 %s16, 1
        // Predicated region
        $region13: #{branch_forward.1} parent=11 // pred_check
          %p212 = pneg %p82
        $region14: #{branch_forward.1} parent=11 // pred_check_branch
          %214 = sbr.rel (%p212) target = $region16
        $region15: #{branch_forward.1} parent=11 // pred_region
          %s215 = smul.u32 16, %s26
          %p216 = scmp.lt.s32.totalorder %s215, 15
          %s217 = scalar_select %p216, %s215, 15
          %s218 = smul.addr %s217, 4
          %s219 = scalar_lea.vmem %s1, %s218
          %s220 = smul.u32 16, %s26
        $region16: #{branch_forward.1} parent=11 // pred_fallthru
          _
        // Predicated region
        $region17: #{branch_forward.1} parent=11 // pred_check
          %p221 = pneg %p103
        $region18: #{branch_forward.1} parent=11 // pred_check_branch
          %223 = sbr.rel (%p221) target = $region20
        $region19: #{branch_forward.1} parent=11 // pred_region
          _
        $region20: #{branch_forward.1} parent=11 // pred_fallthru
          _
        // Predicated region
        $region21: #{branch_forward.1} parent=11 // pred_check
          %p224 = pneg %p124
        $region22: #{branch_forward.1} parent=11 // pred_check_branch
          %226 = sbr.rel (%p224) target = $region24
        $region23: #{branch_forward.1} parent=11 // pred_region
          _
        $region24: #{branch_forward.1} parent=11 // pred_fallthru
          _
        // Predicated region
        $region25: #{branch_forward.1} parent=11 // pred_check
          %p227 = pneg %p145
        $region26: #{branch_forward.1} parent=11 // pred_check_branch
          %229 = sbr.rel (%p227) target = $region28
        $region27: #{branch_forward.1} parent=11 // pred_region
          _
        $region28: #{branch_forward.1} parent=11 // pred_fallthru
          _
      $region12: #{branch_forward.1} parent=5 // pred_fallthru
        _
      %p230 = scmp.lt.s32.totalorder %s16, 2
      // Predicated region
      $region29: #{branch_forward.1} parent=5 // pred_check
        %p231 = pneg %p230
      $region30: #{branch_forward.1} parent=5 // pred_check_branch
        %233 = sbr.rel (%p231) target = $region32
      $region31: #{branch_forward.1} parent=5 // pred_region
        // Predicated region
        $region33: #{branch_forward.1} parent=31 // pred_check
          %p234 = pneg %p50
        $region34: #{branch_forward.1} parent=31 // pred_check_branch
          %236 = sbr.rel (%p234) target = $region36
        $region35: #{branch_forward.1} parent=31 // pred_region
          %s237 = smul.u32 4, %s23
          %p238 = scmp.lt.s32.totalorder %s237, 7
          %s239 = scalar_select %p238, %s237, 7
          %p240 = scmp.lt.s32.totalorder %s24, 0
          %s241 = scalar_select %p240, %s24, 0
          %s242 = sadd.s32 %s241, %s239
          %s243 = smul.addr %s242, 4
          %s244 = scalar_lea.vmem %s0, %s243
          %s245 = smul.u32 4, %s23
        $region36: #{branch_forward.1} parent=31 // pred_fallthru
          _
      $region32: #{branch_forward.1} parent=5 // pred_fallthru
        _
      %p246 = scmp.le.s32.totalorder 1, %s16
      %p247 = scmp.lt.s32.totalorder %s16, 3
      %p248 = pnand %p246, %p247
      %p249 = pneg %p248
      // Predicated region
      $region37: #{branch_forward.1} parent=5 // pred_check
        _
      $region38: #{branch_forward.1} parent=5 // pred_check_branch
        %251 = sbr.rel (%p248) target = $region40
      $region39: #{branch_forward.1} parent=5 // pred_region
        %s252 = ssub.s32 %s16, 1
        %s253 = smul.u32 4, %s25
        %p254 = scmp.lt.s32.totalorder %s253, 7
        %s255 = scalar_select %p254, %s253, 7
        %p256 = scmp.lt.s32.totalorder %s26, 0
        %s257 = scalar_select %p256, %s26, 0
        %s258 = sadd.s32 %s257, %s255
        %s259 = smul.addr %s258, 4
        %s260 = scalar_lea.vmem %s0, %s259
        %p261 = pneg %p56
        %p262 = pneg %p53
        %s263 = smul.u32 16, %s26
        %p264 = scmp.lt.s32.totalorder %s263, 15
        %s265 = scalar_select %p264, %s263, 15
        %s266 = smul.addr %s265, 4
        %s267 = scalar_lea.vmem %s1, %s266
        %p268 = pneg %p82
        %p269 = pneg %p79
        %p270 = pneg %p103
        %p271 = pneg %p100
        %p272 = pneg %p124
        %p273 = pneg %p121
        %p274 = pneg %p145
        %p275 = pneg %p142
        %p276 = pneg %p171
        %p277 = pneg %p168
        %s278 = sand.u32 %s158, 1
        %s279 = scalar_lea.sflag [#allocation4], %s278
        %s280 = sand.u32 %s158, 1
        %s281 = smul.addr %s280, 32
        %s282 = scalar_lea.vmem [#allocation3], %s281
        %p283 = pneg %p197
        %p284 = pneg %p194
        %s285 = smul.u32 4, %s25
        %p286 = scmp.lt.s32.totalorder %s285, 7
        %s287 = scalar_select %p286, %s285, 7
        %s288 = smul.addr %s287, 8
        %s289 = scalar_lea.vmem %s6, %s288
        %s290 = smul.u32 4, %s25
        %p291 = scmp.lt.s32.totalorder %s290, 7
        %s292 = scalar_select %p291, %s290, 7
        %p293 = scmp.lt.s32.totalorder %s26, 0
        %s294 = scalar_select %p293, %s26, 0
        %s295 = sadd.s32 %s294, %s292
        %s296 = smul.addr %s295, 4
        %s297 = scalar_lea.vmem %s0, %s296
        %s298 = smul.u32 4, %s25
        %s299 = smul.u32 16, %s26
        %p300 = scmp.lt.s32.totalorder %s299, 15
        %s301 = scalar_select %p300, %s299, 15
        %s302 = smul.addr %s301, 4
        %s303 = scalar_lea.vmem %s1, %s302
        %s304 = smul.u32 16, %s26
        %s305 = smul.u32 4, %s25
        %s306 = smul.u32 4, %s25
        %p307 = scmp.lt.s32.totalorder %s306, 7
        %s308 = scalar_select %p307, %s306, 7
        %s309 = smul.addr %s308, 8
        %s310 = scalar_lea.vmem %s6, %s309
        %s311 = smul.u32 4, %s25
        %p312 = scmp.eq.s32.totalorder %s26, 0
        // Predicated region
        $region41: #{branch_forward.1} parent=39 // pred_check
          %p313 = pneg %p312
        $region42: #{branch_forward.1} parent=39 // pred_check_branch
          %315 = sbr.rel (%p313) target = $region44
        $region43: #{branch_forward.1} parent=39 // pred_region
          %316 = vst [vmem:[#allocation2] sm:$0xff] 0.0
          %317 = vst [vmem:[#allocation2 + $0x8] sm:$0xff] 0.0
          %318 = vst [vmem:[#allocation2 + $0x10] sm:$0xff] 0.0
          %319 = vst [vmem:[#allocation2 + $0x18] sm:$0xff] 0.0
        $region44: #{branch_forward.1} parent=39 // pred_fallthru
          _
        %v320 = vld [vmem:[#allocation2] sm:$0xff]
        %v321 = vld [vmem:[#allocation2 + $0x8] sm:$0xff]
        %v322 = vld [vmem:[#allocation2 + $0x10] sm:$0xff]
        %v323 = vld [vmem:[#allocation2 + $0x18] sm:$0xff]
        %v324 = vld [vmem:[%s297] sm:$0xf]
        %v325 = vld [vmem:[%s297 + $0x4] sm:$0xf]
        %v326 = vld [vmem:[%s297 + $0x8] sm:$0xf]
        %v327 = vld [vmem:[%s297 + $0xc] sm:$0xf]
        %v328 = vld [vmem:[%s303] sm:$0xf]
        %v329 = vld [vmem:[%s303 + $0x4] sm:$0xf]
        %v330 = vld [vmem:[%s303 + $0x8] sm:$0xf]
        %v331 = vld [vmem:[%s303 + $0xc] sm:$0xf]
        %v332 = vld [vmem:[%s303 + $0x10] sm:$0xf]
        %v333 = vld [vmem:[%s303 + $0x14] sm:$0xf]
        %v334 = vld [vmem:[%s303 + $0x18] sm:$0xf]
        %v335 = vld [vmem:[%s303 + $0x1c] sm:$0xf]
        %v336 = vld [vmem:[%s303 + $0x20] sm:$0xf]
        %v337 = vld [vmem:[%s303 + $0x24] sm:$0xf]
        %v338 = vld [vmem:[%s303 + $0x28] sm:$0xf]
        %v339 = vld [vmem:[%s303 + $0x2c] sm:$0xf]
        %v340 = vld [vmem:[%s303 + $0x30] sm:$0xf]
        %v341 = vld [vmem:[%s303 + $0x34] sm:$0xf]
        %v342 = vld [vmem:[%s303 + $0x38] sm:$0xf]
        %v343 = vld [vmem:[%s303 + $0x3c] sm:$0xf]
        %v348 = vunpack.c.l.b16 %v324
        %v349 = vunpack.c.l.b16 %v325
        %v350 = vunpack.c.l.b16 %v326
        %v351 = vunpack.c.l.b16 %v327
        %v352 = vpack.c.b16 %v349, %v348
        %v353 = vpack.c.b16 %v351, %v350
        %v372 = vunpack.c.l.b16 %v328
        %v373 = vunpack.c.l.b16 %v329
        %v374 = vunpack.c.l.b16 %v330
        %v375 = vunpack.c.l.b16 %v331
        %v376 = vunpack.c.l.b16 %v332
        %v377 = vunpack.c.l.b16 %v333
        %v378 = vunpack.c.l.b16 %v334
        %v379 = vunpack.c.l.b16 %v335
        %v380 = vunpack.c.l.b16 %v336
        %v381 = vunpack.c.l.b16 %v337
        %v382 = vunpack.c.l.b16 %v338
        %v383 = vunpack.c.l.b16 %v339
        %v384 = vunpack.c.l.b16 %v340
        %v385 = vunpack.c.l.b16 %v341
        %v386 = vunpack.c.l.b16 %v342
        %v387 = vunpack.c.l.b16 %v343
        %v388 = vpack.c.b16 %v373, %v372
        %v389 = vpack.c.b16 %v375, %v374
        %v390 = vpack.c.b16 %v377, %v376
        %v391 = vpack.c.b16 %v379, %v378
        %v392 = vpack.c.b16 %v381, %v380
        %v393 = vpack.c.b16 %v383, %v382
        %v394 = vpack.c.b16 %v385, %v384
        %v395 = vpack.c.b16 %v387, %v386
        %404 = vmatpush.bf16.msra.mxu0 %v395
        %405 = vmatpush.bf16.msra.mxu0 %v394
        %406 = vmatpush.bf16.msra.mxu0 %v393
        %407 = vmatpush.bf16.msra.mxu0 %v392
        %408 = vmatpush.bf16.msra.mxu0 %v391
        %409 = vmatpush.bf16.msra.mxu0 %v390
        %410 = vmatpush.bf16.msra.mxu0 %v389
        %411 = vmatpush.bf16.msra.mxu0 %v388
        %412 = vmatmul.bf16.gmra.mxu0 %v352
        %v413 = vpop.f32.mrf.mxu0
        %v414 = vadd.f32 0.0, %v413
        %v415 = vpop.f32.mrf.mxu0
        %v416 = vadd.f32 0.0, %v415
        %417 = vmatmul.bf16.gmra.mxu0 %v353
        %v418 = vpop.f32.mrf.mxu0
        %v419 = vadd.f32 0.0, %v418
        %v420 = vpop.f32.mrf.mxu0
        %v421 = vadd.f32 0.0, %v420
        %422 = vdwg.mxu0
        %v423 = vadd.f32 %v320, %v414
        %v424 = vadd.f32 %v321, %v416
        %v425 = vadd.f32 %v322, %v419
        %v426 = vadd.f32 %v323, %v421
        %427 = vst [vmem:[#allocation2] sm:$0xff] %v423
        %428 = vst [vmem:[#allocation2 + $0x8] sm:$0xff] %v424
        %429 = vst [vmem:[#allocation2 + $0x10] sm:$0xff] %v425
        %430 = vst [vmem:[#allocation2 + $0x18] sm:$0xff] %v426
        // Predicated region
        $region45: #{branch_forward.1} parent=39 // pred_check
          %p431 = pneg %p312
        $region46: #{branch_forward.1} parent=39 // pred_check_branch
          %433 = sbr.rel (%p431) target = $region48
        $region47: #{branch_forward.1} parent=39 // pred_region
          %v434 = vld [vmem:[#allocation2] sm:$0xff]
          %v435 = vld [vmem:[#allocation2 + $0x8] sm:$0xff]
          %v436 = vld [vmem:[#allocation2 + $0x10] sm:$0xff]
          %v437 = vld [vmem:[#allocation2 + $0x18] sm:$0xff]
          %v438 = vld [vmem:[%s2] sm:$0x1]
          %v440 = vperm.slane %v438, 0
          %v442 = vadd.f32 %v434, %v440
          %v443 = vadd.f32 %v435, %v440
          %v444 = vadd.f32 %v436, %v440
          %v445 = vadd.f32 %v437, %v440
          %446 = vst [vmem:[%s282] sm:$0xff] %v442
          %447 = vst [vmem:[%s282 + $0x8] sm:$0xff] %v443
          %448 = vst [vmem:[%s282 + $0x10] sm:$0xff] %v444
          %449 = vst [vmem:[%s282 + $0x18] sm:$0xff] %v445
          %v450 = vpack.c.bf16 %v443, %v442
          %v451 = vpack.c.bf16 %v445, %v444
          %v452 = vld [vmem:[%s3] sm:$0xf]
          %v453 = vld [vmem:[%s3 + $0x4] sm:$0xf]
          %v454 = vld [vmem:[%s3 + $0x8] sm:$0xf]
          %v455 = vld [vmem:[%s3 + $0xc] sm:$0xf]
          %v456 = vld [vmem:[%s3 + $0x10] sm:$0xf]
          %v457 = vld [vmem:[%s3 + $0x14] sm:$0xf]
          %v458 = vld [vmem:[%s3 + $0x18] sm:$0xf]
          %v459 = vld [vmem:[%s3 + $0x1c] sm:$0xf]
          %v460 = vld [vmem:[%s3 + $0x20] sm:$0xf]
          %v461 = vld [vmem:[%s3 + $0x24] sm:$0xf]
          %v462 = vld [vmem:[%s3 + $0x28] sm:$0xf]
          %v463 = vld [vmem:[%s3 + $0x2c] sm:$0xf]
          %v464 = vld [vmem:[%s3 + $0x30] sm:$0xf]
          %v465 = vld [vmem:[%s3 + $0x34] sm:$0xf]
          %v466 = vld [vmem:[%s3 + $0x38] sm:$0xf]
          %v467 = vld [vmem:[%s3 + $0x3c] sm:$0xf]
          %v468 = vld [vmem:[%s4] sm:$0x1]
          %v470 = vperm.slane %v468, 0
          %v488 = vunpack.c.l.b16 %v452
          %v489 = vunpack.c.l.b16 %v453
          %v490 = vunpack.c.l.b16 %v454
          %v491 = vunpack.c.l.b16 %v455
          %v492 = vunpack.c.l.b16 %v456
          %v493 = vunpack.c.l.b16 %v457
          %v494 = vunpack.c.l.b16 %v458
          %v495 = vunpack.c.l.b16 %v459
          %v496 = vunpack.c.l.b16 %v460
          %v497 = vunpack.c.l.b16 %v461
          %v498 = vunpack.c.l.b16 %v462
          %v499 = vunpack.c.l.b16 %v463
          %v500 = vunpack.c.l.b16 %v464
          %v501 = vunpack.c.l.b16 %v465
          %v502 = vunpack.c.l.b16 %v466
          %v503 = vunpack.c.l.b16 %v467
          %v504 = vpack.c.b16 %v489, %v488
          %v505 = vpack.c.b16 %v491, %v490
          %v506 = vpack.c.b16 %v493, %v492
          %v507 = vpack.c.b16 %v495, %v494
          %v508 = vpack.c.b16 %v497, %v496
          %v509 = vpack.c.b16 %v499, %v498
          %v510 = vpack.c.b16 %v501, %v500
          %v511 = vpack.c.b16 %v503, %v502
          %520 = vmatpush.bf16.msra.mxu0 %v511
          %521 = vmatpush.bf16.msra.mxu0 %v510
          %522 = vmatpush.bf16.msra.mxu0 %v509
          %523 = vmatpush.bf16.msra.mxu0 %v508
          %524 = vmatpush.bf16.msra.mxu0 %v507
          %525 = vmatpush.bf16.msra.mxu0 %v506
          %526 = vmatpush.bf16.msra.mxu0 %v505
          %527 = vmatpush.bf16.msra.mxu0 %v504
          %528 = vmatmul.bf16.gmra.mxu0 %v450
          %v529 = vpop.f32.mrf.mxu0
          %v530 = vadd.f32 %v470, %v529
          %v531 = vpop.f32.mrf.mxu0
          %v532 = vadd.f32 %v470, %v531
          %533 = vmatmul.bf16.gmra.mxu0 %v451
          %v534 = vpop.f32.mrf.mxu0
          %v535 = vadd.f32 %v470, %v534
          %v536 = vpop.f32.mrf.mxu0
          %v537 = vadd.f32 %v470, %v536
          %538 = vdwg.mxu0
          %539 = vst [vmem:[%s310] sm:$0xff] %v530
          %540 = vst [vmem:[%s310 + $0x8] sm:$0xff] %v532
          %541 = vst [vmem:[%s310 + $0x10] sm:$0xff] %v535
          %542 = vst [vmem:[%s310 + $0x18] sm:$0xff] %v537
        $region48: #{branch_forward.1} parent=39 // pred_fallthru
          _
        %s543 = sand.u32 %s158, 1
        %s544 = scalar_lea.sflag [#allocation4], %s543
        %s545 = sand.u32 %s158, 1
        %s546 = smul.addr %s545, 32
        %s547 = scalar_lea.vmem [#allocation3], %s546
        %s548 = smul.u32 4, %s25
        %p549 = scmp.lt.s32.totalorder %s548, 7
        %s550 = scalar_select %p549, %s548, 7
        %s551 = smul.addr %s550, 8
        %s552 = scalar_lea.vmem %s6, %s551
        // Predicated region
        $region49: #{branch_forward.1} parent=39 // pred_check
          %p553 = pneg %p168
        $region50: #{branch_forward.1} parent=39 // pred_check_branch
          %555 = sbr.rel (%p553) target = $region52
        $region51: #{branch_forward.1} parent=39 // pred_region
          %s556 = smul.u32 4, %s25
          %558 = vsyncadd %s544, 0
          %s559 = smul.addr %s556, 8
          %s560 = scalar_lea.hbm %s5, %s559
          %s561 = sshll.u32 %s547, 4
          %s562 = int_to_ptr.vmem [resolvable:$true] %s561
          %s563 = sshll.u32 %s560, 4
          %s564 = int_to_ptr.hbm [resolvable:$true] %s563
          %569 = dma.vmem_to_hbm [thread:$0]  %s562, 512, %s564, %s544, 128, 128, 8
        $region52: #{branch_forward.1} parent=39 // pred_fallthru
          _
        // Predicated region
        $region53: #{branch_forward.1} parent=39 // pred_check
          %p570 = pneg %p194
        $region54: #{branch_forward.1} parent=39 // pred_check_branch
          %572 = sbr.rel (%p570) target = $region56
        $region55: #{branch_forward.1} parent=39 // pred_region
          %s573 = smul.u32 4, %s25
        $region56: #{branch_forward.1} parent=39 // pred_fallthru
          _
      $region40: #{branch_forward.1} parent=5 // pred_fallthru
        _
      %p574 = scmp.le.s32.totalorder 2, %s16
      // Predicated region
      $region57: #{branch_forward.1} parent=5 // pred_check
        %p575 = pneg %p574
      $region58: #{branch_forward.1} parent=5 // pred_check_branch
        %577 = sbr.rel (%p575) target = $region60
      $region59: #{branch_forward.1} parent=5 // pred_region
        %s578 = ssub.s32 %s16, 2
        // Predicated region
        $region61: #{branch_forward.1} parent=59 // pred_check
          %p579 = pneg %p174
        $region62: #{branch_forward.1} parent=59 // pred_check_branch
          %581 = sbr.rel (%p579) target = $region64
        $region63: #{branch_forward.1} parent=59 // pred_region
          %s582 = sand.u32 %s159, 1
          %s583 = scalar_lea.sflag [#allocation4], %s582
          %s584 = sand.u32 %s159, 1
          %s585 = smul.addr %s584, 32
          %s586 = scalar_lea.vmem [#allocation3], %s585
          %588 = dma.done %s583, 512
        $region64: #{branch_forward.1} parent=59 // pred_fallthru
          _
        // Predicated region
        $region65: #{branch_forward.1} parent=59 // pred_check
          %p589 = pneg %p200
        $region66: #{branch_forward.1} parent=59 // pred_check_branch
          %591 = sbr.rel (%p589) target = $region68
        $region67: #{branch_forward.1} parent=59 // pred_region
          %s592 = smul.u32 4, %s27
          %p593 = scmp.lt.s32.totalorder %s592, 7
          %s594 = scalar_select %p593, %s592, 7
          %s595 = smul.addr %s594, 8
          %s596 = scalar_lea.vmem %s6, %s595
        $region68: #{branch_forward.1} parent=59 // pred_fallthru
          _
      $region60: #{branch_forward.1} parent=5 // pred_fallthru
        _
    $region6: #{branch_forward.1} parent=1 // loop_footer
      %s20 = sadd.s32 1, %s16
    $region7: #{branch_forward.1} parent=1 // loop_footer_branch
      %15 = sbr.rel target = $region3
    $region8: #{branch_forward.1} parent=1 // loop_exit
      _
    %597 = vsyncpa [#allocation4], 1
    %s598 = scalar_lea.sflag [#allocation4], 1
    %599 = vsyncpa %s598, 1

</llo_original>
